<compile_context>
chip_gen: v7x
topology: tpu7x:2x2x1
jax: 0.10.0
libtpu: 0.0.40
codegen_flags: <defaults>
</compile_context>

<pallas_src>
import jax
import jax.numpy as jnp
from jax.experimental import pallas as pl
from jax.experimental.pallas import tpu as pltpu


def _round_down8(n: int) -> int:
    return max(8, (n // 8) * 8)


def make_label_smoothing(padding_idx: int, smoothing: float, N: int, V: int,
                         x_dtype=jnp.float32, tile_rows: int | None = None):
    """Returns fn(x:(N,V), target:(N,)) -> scalar label-smoothed NLL sum."""
    confidence = 1.0 - smoothing
    itemsize = jnp.dtype(x_dtype).itemsize

    # ---- Tile sizing: largest row tile whose double-buffered x block stays
    # within a conservative budget (safe on v7x's 64 MiB VMEM; v5e/v6e have
    # 128 MiB).  Per-step pipeline overhead (~0.35us) is amortized over a big
    # tile instead of 8 rows.
    if tile_rows is None:
        x_budget = 16 * 1024 * 1024                    # 2x double-buffered x tile
        tr = x_budget // (2 * V * itemsize)
        tr = min(tr, 1024)                             # diminishing returns past ~1K rows
        tr = min(tr, _round_down8(N))                  # keep block <= (padded) array
        tile_rows = _round_down8(int(tr))

    num_tiles = pl.cdiv(N, tile_rows)
    inv_V = 1.0 / V

    def kernel(x_ref, t_ref, out_ref):
        x = x_ref[...].astype(jnp.float32)                       # (TM, V)
        t = t_ref[...]                                           # (TM, 1) int32

        # Mask trailing OOB rows of the last (partial) tile and padding tokens.
        row = (pl.program_id(0) * tile_rows
               + jax.lax.broadcasted_iota(jnp.int32, (tile_rows, 1), 0))
        valid = (row < N) & (t != padding_idx)                   # (TM, 1)

        # Stable log-softmax pieces without materializing logprobs:
        #   logprobs = x - m - lse
        #   nll      = -(x_t - m - lse) = m + lse - x_t
        #   smooth   = -mean(logprobs)  = m + lse - mean(x, -1)
        m = jnp.max(x, axis=-1, keepdims=True)                   # (TM, 1)
        lse = jnp.log(jnp.sum(jnp.exp(x - m), axis=-1, keepdims=True))
        col = jax.lax.broadcasted_iota(jnp.int32, (tile_rows, V), 1)
        x_t = jnp.sum(jnp.where(col == t, x, 0.0), axis=-1, keepdims=True)
        row_mean = jnp.sum(x, axis=-1, keepdims=True) * inv_V

        nll = m + lse - x_t
        smooth = m + lse - row_mean
        per_row = jnp.where(valid, confidence * nll + smoothing * smooth, 0.0)

        # One lane-dense (8,128) partial-sum block per tile (unmasked vst, no
        # read-modify-write of a resident accumulator -> "parallel" grid is safe).
        out_ref[...] = jnp.full((1, 8, 128), jnp.sum(per_row), dtype=jnp.float32)

    call = pl.pallas_call(
        kernel,
        out_shape=jax.ShapeDtypeStruct((num_tiles, 8, 128), jnp.float32),
        grid_spec=pltpu.PrefetchScalarGridSpec(
            num_scalar_prefetch=0,
            grid=(num_tiles,),
            in_specs=[
                pl.BlockSpec((tile_rows, V), lambda i: (i, 0)),
                # (TM, 1) int32 block; pads to (TM, 128) in VMEM but that is
                # small vs. the x double-buffer.  TODO(synk): could move the
                # targets to SMEM via scalar prefetch to drop the padded buffer.
                pl.BlockSpec((tile_rows, 1), lambda i: (i, 0)),
            ],
            out_specs=pl.BlockSpec((1, 8, 128), lambda i: (i, 0, 0)),
        ),
        compiler_params=pltpu.CompilerParams(
            dimension_semantics=("parallel",),
            vmem_limit_bytes=48 * 1024 * 1024,   # > default scoped limit, < v7x 64 MiB
        ),
    )

    def label_smoothing(x, target):
        # x: (N, V) float (f32 or bf16 — cast happens in-kernel), target: (N,) int
        t2d = target.astype(jnp.int32).reshape(N, 1)
        partial = call(x, t2d)                    # (num_tiles, 8, 128)
        return jnp.sum(partial[:, 0, 0])

    return label_smoothing


def label_smoothing_ref(x, target, padding_idx, smoothing):
    confidence = 1.0 - smoothing
    logprobs = jax.nn.log_softmax(x.astype(jnp.float32), axis=-1)
    non_pad = target != padding_idx
    nll = -jnp.take_along_axis(logprobs, target[:, None], axis=-1)[:, 0]
    smooth = -jnp.mean(logprobs, axis=-1)
    loss = confidence * nll + smoothing * smooth
    return jnp.sum(jnp.where(non_pad, loss, 0.0))


if __name__ == "__main__":
    # Small deterministic example; N deliberately NOT a multiple of the tile
    # so the cdiv-grid + row-mask tail path is exercised.
    N, V = 19, 128
    padding_idx = 0
    smoothing = 0.1

    key = jax.random.PRNGKey(0)
    kx, kt = jax.random.split(key)
    x = jax.random.normal(kx, (N, V), dtype=jnp.float32)
    target = jax.random.randint(kt, (N,), 0, V, dtype=jnp.int32)
    # Force a couple of padding tokens so the mask path is exercised.
    target = target.at[1].set(padding_idx).at[5].set(padding_idx)

    fn = jax.jit(make_label_smoothing(padding_idx, smoothing, N, V))
    out = fn(x, target)
    jax.block_until_ready(out)

    ref = label_smoothing_ref(x, target, padding_idx, smoothing)
    assert jnp.allclose(out, ref, rtol=1e-5, atol=1e-4), (out, ref)
    print("KERNEL_OK")
</pallas_src>

<mosaic_0001>
module attributes {stable_mosaic.version = 11 : i64} {
  func.func @kernel(%arg0: i32, %arg1: memref<16x128xf32, #tpu.memory_space<vmem>>, %arg2: memref<16x1xi32, #tpu.memory_space<vmem>>, %arg3: memref<1x8x128xf32, #tpu.memory_space<vmem>>) attributes {dimension_semantics = [#tpu.dimension_semantics<parallel>], iteration_bounds = array<i64: 2>, scalar_prefetch = 0 : i64, scratch_operands = 0 : i64, tpu.core_type = #tpu.core_type<tc>, window_params = [{transform_indices = @transform_0, window_bounds = array<i64: 16, 128>}, {transform_indices = @transform_1, window_bounds = array<i64: 16, 1>}, {transform_indices = @transform_2, window_bounds = array<i64: 1, 8, 128>}]} {
    %c0 = arith.constant 0 : index
    %c0_0 = arith.constant 0 : index
    %0 = vector.load %arg1[%c0, %c0_0] : memref<16x128xf32, #tpu.memory_space<vmem>>, vector<16x128xf32>
    %c0_1 = arith.constant 0 : index
    %c0_2 = arith.constant 0 : index
    %1 = vector.load %arg2[%c0_1, %c0_2] : memref<16x1xi32, #tpu.memory_space<vmem>>, vector<16x1xi32>
    %c16_i32 = arith.constant 16 : i32
    %2 = arith.muli %arg0, %c16_i32 : i32
    %3 = tpu.iota {dimensions = array<i32: 0>} : vector<16x1xi32>
    %4 = vector.broadcast %2 : i32 to vector<16x1xi32>
    %5 = arith.addi %4, %3 : vector<16x1xi32>
    %c19_i32 = arith.constant 19 : i32
    %6 = vector.broadcast %c19_i32 : i32 to vector<16x1xi32>
    %7 = arith.cmpi slt, %5, %6 : vector<16x1xi32>
    %c0_i32 = arith.constant 0 : i32
    %8 = vector.broadcast %c0_i32 : i32 to vector<16x1xi32>
    %9 = arith.cmpi ne, %1, %8 : vector<16x1xi32>
    %10 = arith.andi %7, %9 : vector<16x1xi1>
    %cst = arith.constant dense<0xFF800000> : vector<16xf32>
    %11 = vector.multi_reduction <maximumf>, %0, %cst [1] : vector<16x128xf32> to vector<16xf32>
    %12 = vector.shape_cast %11 : vector<16xf32> to vector<16x1xf32>
    %13 = vector.broadcast %12 : vector<16x1xf32> to vector<16x128xf32>
    %14 = arith.subf %0, %13 : vector<16x128xf32>
    %15 = math.exp %14 : vector<16x128xf32>
    %cst_3 = arith.constant dense<0.000000e+00> : vector<16xf32>
    %16 = vector.multi_reduction <add>, %15, %cst_3 [1] : vector<16x128xf32> to vector<16xf32>
    %17 = vector.shape_cast %16 : vector<16xf32> to vector<16x1xf32>
    %18 = math.log %17 : vector<16x1xf32>
    %19 = tpu.iota {dimensions = array<i32: 1>} : vector<16x128xi32>
    %20 = vector.broadcast %1 : vector<16x1xi32> to vector<16x128xi32>
    %21 = arith.cmpi eq, %19, %20 : vector<16x128xi32>
    %cst_4 = arith.constant 0.000000e+00 : f32
    %22 = vector.broadcast %cst_4 : f32 to vector<16x128xf32>
    %23 = arith.select %21, %0, %22 : vector<16x128xi1>, vector<16x128xf32>
    %cst_5 = arith.constant dense<0.000000e+00> : vector<16xf32>
    %24 = vector.multi_reduction <add>, %23, %cst_5 [1] : vector<16x128xf32> to vector<16xf32>
    %25 = vector.shape_cast %24 : vector<16xf32> to vector<16x1xf32>
    %cst_6 = arith.constant dense<0.000000e+00> : vector<16xf32>
    %26 = vector.multi_reduction <add>, %0, %cst_6 [1] : vector<16x128xf32> to vector<16xf32>
    %27 = vector.shape_cast %26 : vector<16xf32> to vector<16x1xf32>
    %cst_7 = arith.constant 7.812500e-03 : f32
    %28 = vector.broadcast %cst_7 : f32 to vector<16x1xf32>
    %29 = arith.mulf %27, %28 : vector<16x1xf32>
    %30 = arith.addf %12, %18 : vector<16x1xf32>
    %31 = arith.subf %30, %25 : vector<16x1xf32>
    %32 = arith.addf %12, %18 : vector<16x1xf32>
    %33 = arith.subf %32, %29 : vector<16x1xf32>
    %cst_8 = arith.constant 0.899999976 : f32
    %34 = vector.broadcast %cst_8 : f32 to vector<16x1xf32>
    %35 = arith.mulf %34, %31 : vector<16x1xf32>
    %cst_9 = arith.constant 1.000000e-01 : f32
    %36 = vector.broadcast %cst_9 : f32 to vector<16x1xf32>
    %37 = arith.mulf %36, %33 : vector<16x1xf32>
    %38 = arith.addf %35, %37 : vector<16x1xf32>
    %cst_10 = arith.constant 0.000000e+00 : f32
    %39 = vector.broadcast %cst_10 : f32 to vector<16x1xf32>
    %40 = arith.select %10, %38, %39 : vector<16x1xi1>, vector<16x1xf32>
    %41 = vector.shape_cast %40 : vector<16x1xf32> to vector<1x16x1xf32>
    %cst_11 = arith.constant dense<0.000000e+00> : vector<1xf32>
    %42 = vector.multi_reduction <add>, %41, %cst_11 [1, 2] : vector<1x16x1xf32> to vector<1xf32>
    %43 = vector.shape_cast %42 : vector<1xf32> to vector<1x1x1xf32>
    %44 = vector.extract %43[0, 0, 0] : f32 from vector<1x1x1xf32>
    %45 = vector.broadcast %44 : f32 to vector<1x8x128xf32>
    %c0_12 = arith.constant 0 : index
    %c0_13 = arith.constant 0 : index
    %c0_14 = arith.constant 0 : index
    %46 = vector.load %arg3[%c0_12, %c0_13, %c0_14] : memref<1x8x128xf32, #tpu.memory_space<vmem>>, vector<1x8x128xf32>
    tpu.vector_store %arg3[%c0_12, %c0_13, %c0_14], %45 {strides = array<i32>} : memref<1x8x128xf32, #tpu.memory_space<vmem>>, vector<1x8x128xf32>,
    return
  }
  func.func @transform_0(%arg0: i32) -> (i32, i32) {
    %c0_i32 = arith.constant 0 : i32
    %c0_i32_0 = arith.constant 0 : i32
    return %arg0, %c0_i32 : i32, i32
  }
  func.func @transform_1(%arg0: i32) -> (i32, i32) {
    %c0_i32 = arith.constant 0 : i32
    %c0_i32_0 = arith.constant 0 : i32
    return %arg0, %c0_i32 : i32, i32
  }
  func.func @transform_2(%arg0: i32) -> (i32, i32, i32) {
    %c0_i32 = arith.constant 0 : i32
    %c0_i32_0 = arith.constant 0 : i32
    %c0_i32_1 = arith.constant 0 : i32
    return %arg0, %c0_i32, %c0_i32_0 : i32, i32, i32
  }
}

</mosaic_0001>

<llo_original>
// kernel: label_smoothing.1
$region0: #{label_smoothing.1}
  #allocation0 [shape = 'u32[]', space=smem, size = 0x4, offset = 0x4, fixed_abs, tag = 'smem constant byte address 0x4 - core index']
  #allocation1 [shape = 'u32[144,128]{1,0:T(1,128)}', space=vmem, size = 0x12000, scoped, tag = 'internal scratch']
  %s0 = inlined_call_operand.vmem [shape: f32[19,128], index: 0, kind: input, shape index: {}]
  %s1 = inlined_call_operand.vmem [shape: s32[19,1], index: 1, kind: input, shape index: {}]
  %s2 = inlined_call_operand.vmem [shape: f32[2,8,128], index: 2, kind: output, shape index: {}]
  %s3 = sld [smem:[#allocation0]]
  $region41: #{label_smoothing.1} parent=0
    _
  %s5 = ssub.s32 1, %s3
  %s6 = scalar_select 0, %s5, %s3
  loop: start=0, step=1, limit=4
  $region2: #{label_smoothing.1} parent=0 // loop_pre_header
    _
  $region3: #{label_smoothing.1} parent=0 // loop_header
    %s8 = sphi 0, %s12
    %p9 = scmp.ge.s32.totalorder %s8, 4
    %s18 = sphi 0, %s20
    %s21 = sphi 0, %s18
    %s22 = sphi 0, %s21
    %s38 = sphi 0, %s22
    %s44 = sphi 0, %s46
    %s47 = sphi 0, %s44
    %s48 = sphi 0, %s47
    %s64 = sphi 0, %s48
    %s70 = sphi 0, %s72
    %s73 = sphi 0, %s70
    %s74 = sphi 0, %s73
    %s90 = sphi 0, %s74
  $region4: #{label_smoothing.1} parent=0 // loop_header_branch
    %11 = sbr.rel (%p9) target = $region8
  $region5: #{label_smoothing.1} parent=0 // loop_body
    %s13 = ssub.s32 %s8, 1
    %s14 = ssub.s32 %s8, 2
    %s15 = sadd.s32 %s8, 1
    %s16 = ssub.s32 %s8, %s15
    %p17 = scmp.eq.s32.totalorder %s16, 0
    %s19 = sadd.s32 %s18, 1
    %s20 = scalar_select %p17, %s18, %s19
    %p23 = pneg %p17
    %p24 = scmp.eq.s32.totalorder %s8, 1
    %p25 = por %p23, %p24
    %p26 = scmp.ne.s32.totalorder %s18, %s21
    %p27 = scmp.eq.s32.totalorder %s8, 0
    %p28 = por %p26, %p27
    %p29 = scmp.ne.s32.totalorder %s18, %s21
    %p30 = scmp.eq.s32.totalorder %s13, 1
    %p31 = por %p29, %p30
    %p32 = scmp.ne.s32.totalorder %s21, %s22
    %p33 = scmp.eq.s32.totalorder %s13, 0
    %p34 = por %p32, %p33
    %p35 = scmp.ne.s32.totalorder %s21, %s22
    %p36 = scmp.eq.s32.totalorder %s14, 1
    %p37 = por %p35, %p36
    %p39 = scmp.ne.s32.totalorder %s22, %s38
    %p40 = scmp.eq.s32.totalorder %s14, 0
    %p41 = por %p39, %p40
    %s42 = ssub.s32 %s8, %s15
    %p43 = scmp.eq.s32.totalorder %s42, 0
    %s45 = sadd.s32 %s44, 1
    %s46 = scalar_select %p43, %s44, %s45
    %p49 = pneg %p43
    %p50 = scmp.eq.s32.totalorder %s8, 1
    %p51 = por %p49, %p50
    %p52 = scmp.ne.s32.totalorder %s44, %s47
    %p53 = scmp.eq.s32.totalorder %s8, 0
    %p54 = por %p52, %p53
    %p55 = scmp.ne.s32.totalorder %s44, %s47
    %p56 = scmp.eq.s32.totalorder %s13, 1
    %p57 = por %p55, %p56
    %p58 = scmp.ne.s32.totalorder %s47, %s48
    %p59 = scmp.eq.s32.totalorder %s13, 0
    %p60 = por %p58, %p59
    %p61 = scmp.ne.s32.totalorder %s47, %s48
    %p62 = scmp.eq.s32.totalorder %s14, 1
    %p63 = por %p61, %p62
    %p65 = scmp.ne.s32.totalorder %s48, %s64
    %p66 = scmp.eq.s32.totalorder %s14, 0
    %p67 = por %p65, %p66
    %s68 = ssub.s32 %s8, %s15
    %p69 = scmp.eq.s32.totalorder %s68, 0
    %s71 = sadd.s32 %s70, 1
    %s72 = scalar_select %p69, %s70, %s71
    %p75 = pneg %p69
    %p76 = scmp.eq.s32.totalorder %s8, 1
    %p77 = por %p75, %p76
    %p78 = scmp.ne.s32.totalorder %s70, %s73
    %p79 = scmp.eq.s32.totalorder %s8, 0
    %p80 = por %p78, %p79
    %p81 = scmp.ne.s32.totalorder %s70, %s73
    %p82 = scmp.eq.s32.totalorder %s13, 1
    %p83 = por %p81, %p82
    %p84 = scmp.ne.s32.totalorder %s73, %s74
    %p85 = scmp.eq.s32.totalorder %s13, 0
    %p86 = por %p84, %p85
    %p87 = scmp.ne.s32.totalorder %s73, %s74
    %p88 = scmp.eq.s32.totalorder %s14, 1
    %p89 = por %p87, %p88
    %p91 = scmp.ne.s32.totalorder %s74, %s90
    %p92 = scmp.eq.s32.totalorder %s14, 0
    %p93 = por %p91, %p92
    %p94 = scmp.le.s32.totalorder 1, %s8
    %p95 = scmp.lt.s32.totalorder %s8, 3
    %p96 = pnand %p94, %p95
    %p97 = pneg %p96
    // Predicated region
    $region9: #{label_smoothing.1} parent=5 // pred_check
      _
    $region10: #{label_smoothing.1} parent=5 // pred_check_branch
      %99 = sbr.rel (%p96) target = $region12
    $region11: #{label_smoothing.1} parent=5 // pred_region
      %s100 = ssub.s32 %s8, 1
    $region12: #{label_smoothing.1} parent=5 // pred_fallthru
      _
    %p101 = scmp.lt.s32.totalorder %s8, 2
    // Predicated region
    $region13: #{label_smoothing.1} parent=5 // pred_check
      %p102 = pneg %p101
    $region14: #{label_smoothing.1} parent=5 // pred_check_branch
      %104 = sbr.rel (%p102) target = $region16
    $region15: #{label_smoothing.1} parent=5 // pred_region
      // Predicated region
      $region17: #{label_smoothing.1} parent=15 // pred_check
        %p105 = pneg %p28
      $region18: #{label_smoothing.1} parent=15 // pred_check_branch
        %107 = sbr.rel (%p105) target = $region20
      $region19: #{label_smoothing.1} parent=15 // pred_region
        %s108 = smul.u32 2, %s8
        %s109 = ssub.s32 3, %s108
        %p110 = scmp.lt.s32.totalorder %s109, 2
        %s111 = scalar_select %p110, %s109, 2
        %s112 = smul.u32 128, %s111
        %p113 = scmp.lt.s32.totalorder %s108, 2
        %s114 = scalar_select %p113, %s108, 2
        %s115 = smul.addr %s114, 8
        %s116 = scalar_lea.vmem %s0, %s115
        %s117 = smul.u32 2, %s8
        %s118 = ssub.s32 3, %s117
        %p119 = scmp.lt.s32.totalorder %s118, 2
        %s120 = scalar_select %p119, %s118, 2
        %s121 = smul.u32 128, %s120
      $region20: #{label_smoothing.1} parent=15 // pred_fallthru
        _
      // Predicated region
      $region21: #{label_smoothing.1} parent=15 // pred_check
        %p122 = pneg %p54
      $region22: #{label_smoothing.1} parent=15 // pred_check_branch
        %124 = sbr.rel (%p122) target = $region24
      $region23: #{label_smoothing.1} parent=15 // pred_region
        %s125 = smul.u32 2, %s8
        %s126 = ssub.s32 3, %s125
        %p127 = scmp.lt.s32.totalorder %s126, 2
        %s128 = scalar_select %p127, %s126, 2
        %s129 = smul.u32 128, %s128
        %p130 = scmp.lt.s32.totalorder %s125, 2
        %s131 = scalar_select %p130, %s125, 2
        %s132 = smul.addr %s131, 8
        %s133 = scalar_lea.vmem %s1, %s132
        %s134 = smul.u32 2, %s8
        %s135 = ssub.s32 3, %s134
        %p136 = scmp.lt.s32.totalorder %s135, 2
        %s137 = scalar_select %p136, %s135, 2
        %s138 = smul.u32 128, %s137
      $region24: #{label_smoothing.1} parent=15 // pred_fallthru
        _
    $region16: #{label_smoothing.1} parent=5 // pred_fallthru
      _
    %p139 = scmp.le.s32.totalorder 1, %s8
    %p140 = scmp.lt.s32.totalorder %s8, 3
    %p141 = pnand %p139, %p140
    %p142 = pneg %p141
    // Predicated region
    $region25: #{label_smoothing.1} parent=5 // pred_check
      _
    $region26: #{label_smoothing.1} parent=5 // pred_check_branch
      %144 = sbr.rel (%p141) target = $region28
    $region27: #{label_smoothing.1} parent=5 // pred_region
      %s145 = ssub.s32 %s8, 1
      %s146 = smul.u32 2, %s13
      %s147 = ssub.s32 3, %s146
      %p148 = scmp.lt.s32.totalorder %s147, 2
      %s149 = scalar_select %p148, %s147, 2
      %s150 = smul.u32 128, %s149
      %p151 = scmp.lt.s32.totalorder %s146, 2
      %s152 = scalar_select %p151, %s146, 2
      %s153 = smul.addr %s152, 8
      %s154 = scalar_lea.vmem %s0, %s153
      %p155 = pneg %p34
      %p156 = pneg %p31
      %s157 = smul.u32 2, %s13
      %s158 = ssub.s32 3, %s157
      %p159 = scmp.lt.s32.totalorder %s158, 2
      %s160 = scalar_select %p159, %s158, 2
      %s161 = smul.u32 128, %s160
      %p162 = scmp.lt.s32.totalorder %s157, 2
      %s163 = scalar_select %p162, %s157, 2
      %s164 = smul.addr %s163, 8
      %s165 = scalar_lea.vmem %s1, %s164
      %p166 = pneg %p60
      %p167 = pneg %p57
      %p168 = pneg %p86
      %p169 = pneg %p83
      %p170 = scmp.lt.s32.totalorder %s13, 1
      %s171 = scalar_select %p170, %s13, 1
      %s172 = smul.addr %s171, 8
      %s173 = scalar_lea.vmem %s2, %s172
      %s174 = smul.u32 2, %s13
      %s175 = ssub.s32 3, %s174
      %p176 = scmp.lt.s32.totalorder %s175, 2
      %s177 = scalar_select %p176, %s175, 2
      %s178 = smul.u32 128, %s177
      %p179 = scmp.lt.s32.totalorder %s174, 2
      %s180 = scalar_select %p179, %s174, 2
      %s181 = smul.addr %s180, 8
      %s182 = scalar_lea.vmem %s0, %s181
      %s183 = smul.u32 2, %s13
      %s184 = ssub.s32 3, %s183
      %p185 = scmp.lt.s32.totalorder %s184, 2
      %s186 = scalar_select %p185, %s184, 2
      %s187 = smul.u32 128, %s186
      %s188 = smul.u32 2, %s13
      %s189 = ssub.s32 3, %s188
      %p190 = scmp.lt.s32.totalorder %s189, 2
      %s191 = scalar_select %p190, %s189, 2
      %s192 = smul.u32 128, %s191
      %p193 = scmp.lt.s32.totalorder %s188, 2
      %s194 = scalar_select %p193, %s188, 2
      %s195 = smul.addr %s194, 8
      %s196 = scalar_lea.vmem %s1, %s195
      %s197 = smul.u32 2, %s13
      %s198 = ssub.s32 3, %s197
      %p199 = scmp.lt.s32.totalorder %s198, 2
      %s200 = scalar_select %p199, %s198, 2
      %s201 = smul.u32 128, %s200
      %p202 = scmp.lt.s32.totalorder %s13, 1
      %s203 = scalar_select %p202, %s13, 1
      %s204 = smul.addr %s203, 8
      %s205 = scalar_lea.vmem %s2, %s204
      %v206 = vld [vmem:[%s182] sm:$0xff]
      %v207 = vld [vmem:[%s182 + $0x8] sm:$0xff]
      %v208 = vld [vmem:[%s196] sm:$0xff]
      %v209 = vld [vmem:[%s196 + $0x8] sm:$0xff]
      %s210 = smul.u32 %s13, 16
      %v211 = vlaneseq
      %v212 = vshrl.u32 %v211, 7
      %v213 = vadd.s32 %v212, 8
      %v214 = vstv %s210
      %v215 = vadd.s32 %v214, %v212
      %v216 = vadd.s32 %v214, %v213
      %vm217 = vcmp.lt.s32.totalorder %v215, 19
      %vm218 = vcmp.lt.s32.totalorder %v216, 19
      %vm219 = vcmp.ne.s32.totalorder %v208, 0
      %vm220 = vcmp.ne.s32.totalorder %v209, 0
      %vm221 = vmand %vm217, %vm219
      %vm222 = vmand %vm218, %vm220
      %223 = vmax.xlane.f32.xlu0 %v206
      %v224 = vpop.xlane.xlu0 %223
      %225 = vmax.xlane.f32.xlu0 %v207
      %v226 = vpop.xlane.xlu0 %225
      %v227 = vsub.f32 %v206, %v224
      %v228 = vsub.f32 %v207, %v226
      %v229 = vmul.f32 %v227, 1.442695
      %v230 = vpow.pop %v229
      %v231 = vmul.f32 %v228, 1.442695
      %v232 = vpow.pop %v231
      %233 = vadd.xlane.f32.xlu0 %v230
      %v234 = vpop.xlane.xlu0 %233
      %235 = vadd.xlane.f32.xlu0 %v232
      %v236 = vpop.xlane.xlu0 %235
      %v237 = vlog2.pop %v234
      %v238 = vmul.f32 %v237, 0.6931472
      %v239 = vlog2.pop %v236
      %v240 = vmul.f32 %v239, 0.6931472
      %v241 = vlaneseq
      %v242 = vand.u32 %v241, 127
      %243 = vset.pattern.permute.xlu0 0
      %244 = vperm.xlu0 %243, %v208
      %v245 = vpop.permute.xlu0 %244
      %246 = vset.pattern.permute.xlu0 0
      %247 = vperm.xlu0 %246, %v209
      %v248 = vpop.permute.xlu0 %247
      %vm249 = vcmp.eq.s32.totalorder %v242, %v245
      %vm250 = vcmp.eq.s32.totalorder %v242, %v248
      %v251 = vsel %vm249, %v206, 0.0
      %v252 = vsel %vm250, %v207, 0.0
      %253 = vadd.xlane.f32.xlu0 %v251
      %v254 = vpop.xlane.xlu0 %253
      %255 = vadd.xlane.f32.xlu0 %v252
      %v256 = vpop.xlane.xlu0 %255
      %257 = vadd.xlane.f32.xlu0 %v206
      %v258 = vpop.xlane.xlu0 %257
      %259 = vadd.xlane.f32.xlu0 %v207
      %v260 = vpop.xlane.xlu0 %259
      %v261 = vmul.f32 %v258, 0.0078125
      %v262 = vmul.f32 %v260, 0.0078125
      %v263 = vadd.f32 %v224, %v238
      %v264 = vadd.f32 %v226, %v240
      %v265 = vsub.f32 %v263, %v254
      %v266 = vsub.f32 %v264, %v256
      %v267 = vsub.f32 %v263, %v261
      %v268 = vsub.f32 %v264, %v262
      %v269 = vmul.f32 %v265, 0.9
      %v270 = vmul.f32 %v266, 0.9
      %v271 = vmul.f32 %v267, 0.1
      %v272 = vmul.f32 %v268, 0.1
      %v273 = vadd.f32 %v269, %v271
      %v274 = vadd.f32 %v270, %v272
      %v275 = vsel %vm221, %v273, 0.0
      %v276 = vsel %vm222, %v274, 0.0
      %vm277 = vcmask 7168
      %v278 = vsel %vm277, %v275, 0.0
      %v279 = vsel %vm277, %v276, 0.0
      %v280 = vadd.f32 %v278, %v279
      %281 = vadd.xlane.f32.xlu0 %v280
      %v282 = vpop.xlane.xlu0 %281
      %v283 = vrot.slane %v282, 4
      %v284 = vadd.f32 %v282, %v283
      %v285 = vrot.slane %v284, 2
      %v286 = vadd.f32 %v284, %v285
      %v287 = vrot.slane %v286, 1
      %v288 = vadd.f32 %v286, %v287
      %s289 = vtos %v288
      %v290 = vstv %s289
      %291 = vst [vmem:[%s205] sm:$0xff] %v290
      %p292 = scmp.lt.s32.totalorder %s13, 1
      %s293 = scalar_select %p292, %s13, 1
      %s294 = smul.addr %s293, 8
      %s295 = scalar_lea.vmem %s2, %s294
      // Predicated region
      $region29: #{label_smoothing.1} parent=27 // pred_check
        %p296 = pneg %p83
      $region30: #{label_smoothing.1} parent=27 // pred_check_branch
        %298 = sbr.rel (%p296) target = $region32
      $region31: #{label_smoothing.1} parent=27 // pred_region
        _
      $region32: #{label_smoothing.1} parent=27 // pred_fallthru
        _
    $region28: #{label_smoothing.1} parent=5 // pred_fallthru
      _
    %p299 = scmp.le.s32.totalorder 2, %s8
    // Predicated region
    $region33: #{label_smoothing.1} parent=5 // pred_check
      %p300 = pneg %p299
    $region34: #{label_smoothing.1} parent=5 // pred_check_branch
      %302 = sbr.rel (%p300) target = $region36
    $region35: #{label_smoothing.1} parent=5 // pred_region
      %s303 = ssub.s32 %s8, 2
      // Predicated region
      $region37: #{label_smoothing.1} parent=35 // pred_check
        %p304 = pneg %p89
      $region38: #{label_smoothing.1} parent=35 // pred_check_branch
        %306 = sbr.rel (%p304) target = $region40
      $region39: #{label_smoothing.1} parent=35 // pred_region
        %p307 = scmp.lt.s32.totalorder %s14, 1
        %s308 = scalar_select %p307, %s14, 1
        %s309 = smul.addr %s308, 8
        %s310 = scalar_lea.vmem %s2, %s309
      $region40: #{label_smoothing.1} parent=35 // pred_fallthru
        _
    $region36: #{label_smoothing.1} parent=5 // pred_fallthru
      _
  $region6: #{label_smoothing.1} parent=0 // loop_footer
    %s12 = sadd.s32 1, %s8
  $region7: #{label_smoothing.1} parent=0 // loop_footer_branch
    %7 = sbr.rel target = $region3
  $region8: #{label_smoothing.1} parent=0 // loop_exit
    _

</llo_original>
